<compile_context>
chip_gen: v7x
topology: tpu7x:2x2x1
jax: 0.10.0
libtpu: 0.0.40
codegen_flags: <defaults>
</compile_context>

<pallas_src>
import functools

import numpy as np
import jax
import jax.numpy as jnp
from jax.experimental import pallas as pl
from jax.experimental.pallas import tpu as pltpu


def _se_kernel(x_ref, w1_ref, b1_ref, w2_ref, b2_ref, out_ref, acc_ref, *, inv_hw):
    """One (batch, spatial-tile) grid step of the SE forward pass.

    x_ref   : (1, C, TS)   lane-dense spatial tile of one batch element
    w1_ref  : (C, HID)     first Linear weight
    b1_ref  : (1, HID)     first Linear bias
    w2_ref  : (HID, C)     second Linear weight
    b2_ref  : (1, C)       second Linear bias
    out_ref : (1, 1, C)    per-batch sigmoid gate
    acc_ref : (1, C) f32   running spatial sum (VMEM scratch, persists over k)
    """
    k = pl.program_id(1)

    @pl.when(k == 0)
    def _init():
        acc_ref[...] = jnp.zeros_like(acc_ref)

    # Partial spatial sum for this tile: (1, C, TS) -> (1, C).  Lane reduction
    # goes to the XLU; accumulation stays in a VMEM scratch, not a live value.
    acc_ref[...] += jnp.sum(x_ref[...], axis=-1)

    @pl.when(k == pl.num_programs(1) - 1)
    def _finalize():
        pooled = acc_ref[...] * inv_hw                                # (1, C)
        h = jnp.dot(pooled, w1_ref[...],
                    preferred_element_type=jnp.float32) + b1_ref[...]  # (1, HID)
        h = jnp.maximum(h, 0.0)
        logits = jnp.dot(h, w2_ref[...],
                         preferred_element_type=jnp.float32) + b2_ref[...]  # (1, C)
        gate = 1.0 / (1.0 + jnp.exp(-logits))                         # sigmoid (EUP)
        out_ref[0] = gate                                             # (1, C) slab


def _pick_spatial_tile(hw: int) -> int:
    """Largest tile that divides H*W, is a multiple of 128, and is <= 2048."""
    if hw % 128 != 0:
        return hw  # fall back to a single full-extent block
    ts = 128
    while ts * 2 <= min(hw, 2048) and hw % (ts * 2) == 0:
        ts *= 2
    return ts


def se_forward(x_nchw, w1, b1, w2, b2):
    """SE module forward.  x: (N, C, H, W); returns (N, C, 1, 1)."""
    N, C, H, W = x_nchw.shape
    hid = w1.shape[1]
    assert w1.shape == (C, hid) and w2.shape == (hid, C)
    HW = H * W

    x = x_nchw.reshape(N, C, HW).astype(jnp.float32)   # free reshape, no transpose
    b1_2d = b1.reshape(1, hid).astype(jnp.float32)
    b2_2d = b2.reshape(1, C).astype(jnp.float32)
    w1 = w1.astype(jnp.float32)
    w2 = w2.astype(jnp.float32)

    ts = _pick_spatial_tile(HW)
    num_tiles = HW // ts

    kernel = functools.partial(_se_kernel, inv_hw=1.0 / float(HW))

    out = pl.pallas_call(
        kernel,
        out_shape=jax.ShapeDtypeStruct((N, 1, C), jnp.float32),
        grid_spec=pltpu.PrefetchScalarGridSpec(
            num_scalar_prefetch=0,
            grid=(N, num_tiles),
            in_specs=[
                pl.BlockSpec((1, C, ts), lambda n, k: (n, 0, k)),   # x tile
                pl.BlockSpec((C, hid), lambda n, k: (0, 0)),        # W1 (constant)
                pl.BlockSpec((1, hid), lambda n, k: (0, 0)),        # b1 (constant)
                pl.BlockSpec((hid, C), lambda n, k: (0, 0)),        # W2 (constant)
                pl.BlockSpec((1, C), lambda n, k: (0, 0)),          # b2 (constant)
            ],
            out_specs=pl.BlockSpec((1, 1, C), lambda n, k: (n, 0, 0)),
            scratch_shapes=[pltpu.VMEM((1, C), jnp.float32)],       # spatial-sum acc
        ),
        compiler_params=pltpu.CompilerParams(
            dimension_semantics=("parallel", "arbitrary")),
    )(x, w1, b1_2d, w2, b2_2d)

    return out.reshape(N, C, 1, 1)


def _reference_forward(x, w1, b1, w2, b2):
    """Pure-JAX reference mirroring the PyTorch SE.forward."""
    pooled = jnp.mean(x, axis=(2, 3))                     # (N, C)
    h = jnp.maximum(pooled @ w1 + b1, 0.0)                # (N, hid)
    gate = jax.nn.sigmoid(h @ w2 + b2)                    # (N, C)
    return gate.reshape(x.shape[0], x.shape[1], 1, 1)


if __name__ == "__main__":
    # planes must be >= r for int(planes / r) >= 1; use planes=64, r=16 -> hidden=4.
    N, C, H, W = 2, 64, 16, 16
    r = 16
    hid = int(C / r)

    key = jax.random.PRNGKey(0)
    k_x, k_w1, k_b1, k_w2, k_b2 = jax.random.split(key, 5)

    x = jax.random.normal(k_x, (N, C, H, W), jnp.float32)
    # Linear weights stored input-major (in, out) so forward is pooled @ W + b
    # (equivalent to PyTorch's x @ weight.T + bias).
    w1 = (1.0 / np.sqrt(C)) * jax.random.normal(k_w1, (C, hid), jnp.float32)
    b1 = 0.1 * jax.random.normal(k_b1, (hid,), jnp.float32)
    w2 = (1.0 / np.sqrt(hid)) * jax.random.normal(k_w2, (hid, C), jnp.float32)
    b2 = 0.1 * jax.random.normal(k_b2, (C,), jnp.float32)

    out = se_forward(x, w1, b1, w2, b2)
    out = jax.block_until_ready(out)

    ref = _reference_forward(x, w1, b1, w2, b2)
    assert out.shape == (N, C, 1, 1)
    np.testing.assert_allclose(np.asarray(out), np.asarray(ref), rtol=1e-5, atol=1e-5)

    print("KERNEL_OK")
</pallas_src>

<mosaic_0001>
module attributes {stable_mosaic.version = 11 : i64} {
  func.func @_se_kernel(%arg0: i32, %arg1: i32, %arg2: memref<1x64x256xf32, #tpu.memory_space<vmem>>, %arg3: memref<64x4xf32, #tpu.memory_space<vmem>>, %arg4: memref<1x4xf32, #tpu.memory_space<vmem>>, %arg5: memref<4x64xf32, #tpu.memory_space<vmem>>, %arg6: memref<1x64xf32, #tpu.memory_space<vmem>>, %arg7: memref<1x1x64xf32, #tpu.memory_space<vmem>>, %arg8: memref<1x64xf32, #tpu.memory_space<vmem>>) attributes {dimension_semantics = [#tpu.dimension_semantics<parallel>, #tpu.dimension_semantics<arbitrary>], iteration_bounds = array<i64: 2, 1>, scalar_prefetch = 0 : i64, scratch_operands = 1 : i64, tpu.core_type = #tpu.core_type<tc>, window_params = [{transform_indices = @transform_0, window_bounds = array<i64: 1, 64, 256>}, {pipeline_mode = #tpu.pipeline_mode<synchronous>, transform_indices = @transform_1, window_bounds = array<i64: 64, 4>}, {pipeline_mode = #tpu.pipeline_mode<synchronous>, transform_indices = @transform_2, window_bounds = array<i64: 1, 4>}, {pipeline_mode = #tpu.pipeline_mode<synchronous>, transform_indices = @transform_3, window_bounds = array<i64: 4, 64>}, {pipeline_mode = #tpu.pipeline_mode<synchronous>, transform_indices = @transform_4, window_bounds = array<i64: 1, 64>}, {transform_indices = @transform_5, window_bounds = array<i64: 1, 1, 64>}]} {
    %c0_i32 = arith.constant 0 : i32
    %0 = arith.cmpi eq, %arg1, %c0_i32 : i32
    %1 = arith.extui %0 : i1 to i32
    %c0_i32_0 = arith.constant 0 : i32
    %2 = arith.cmpi ne, %1, %c0_i32_0 : i32
    scf.if %2 {
      %cst_9 = arith.constant 0.000000e+00 : f32
      %11 = vector.broadcast %cst_9 : f32 to vector<1x64xf32>
      %c0_10 = arith.constant 0 : index
      %c0_11 = arith.constant 0 : index
      %12 = vector.load %arg8[%c0_10, %c0_11] : memref<1x64xf32, #tpu.memory_space<vmem>>, vector<1x64xf32>
      tpu.vector_store %arg8[%c0_10, %c0_11], %11 {strides = array<i32>} : memref<1x64xf32, #tpu.memory_space<vmem>>, vector<1x64xf32>,
    } else {
    }
    %c0 = arith.constant 0 : index
    %c0_1 = arith.constant 0 : index
    %3 = vector.load %arg8[%c0, %c0_1] : memref<1x64xf32, #tpu.memory_space<vmem>>, vector<1x64xf32>
    %c0_2 = arith.constant 0 : index
    %c0_3 = arith.constant 0 : index
    %c0_4 = arith.constant 0 : index
    %4 = vector.load %arg2[%c0_2, %c0_3, %c0_4] : memref<1x64x256xf32, #tpu.memory_space<vmem>>, vector<1x64x256xf32>
    %cst = arith.constant dense<0.000000e+00> : vector<1x64xf32>
    %5 = vector.multi_reduction <add>, %4, %cst [2] : vector<1x64x256xf32> to vector<1x64xf32>
    %6 = arith.addf %3, %5 : vector<1x64xf32>
    %c0_5 = arith.constant 0 : index
    %c0_6 = arith.constant 0 : index
    %7 = vector.load %arg8[%c0_5, %c0_6] : memref<1x64xf32, #tpu.memory_space<vmem>>, vector<1x64xf32>
    tpu.vector_store %arg8[%c0_5, %c0_6], %6 {strides = array<i32>} : memref<1x64xf32, #tpu.memory_space<vmem>>, vector<1x64xf32>,
    %c0_i32_7 = arith.constant 0 : i32
    %8 = arith.cmpi eq, %arg1, %c0_i32_7 : i32
    %9 = arith.extui %8 : i1 to i32
    %c0_i32_8 = arith.constant 0 : i32
    %10 = arith.cmpi ne, %9, %c0_i32_8 : i32
    scf.if %10 {
      %c0_9 = arith.constant 0 : index
      %c0_10 = arith.constant 0 : index
      %11 = vector.load %arg8[%c0_9, %c0_10] : memref<1x64xf32, #tpu.memory_space<vmem>>, vector<1x64xf32>
      %cst_11 = arith.constant 3.906250e-03 : f32
      %12 = vector.broadcast %cst_11 : f32 to vector<1x64xf32>
      %13 = arith.mulf %11, %12 : vector<1x64xf32>
      %c0_12 = arith.constant 0 : index
      %c0_13 = arith.constant 0 : index
      %14 = vector.load %arg3[%c0_12, %c0_13] : memref<64x4xf32, #tpu.memory_space<vmem>>, vector<64x4xf32>
      %cst_14 = arith.constant dense<0.000000e+00> : vector<1x4xf32>
      %15 = tpu.matmul %13, %14, %cst_14 {dimension_numbers = #tpu.dot_dimension_numbers<[1], [0], [0], [1], [0, 0, 1, 1], [], []>} : vector<1x64xf32>, vector<64x4xf32>, vector<1x4xf32> -> vector<1x4xf32>
      %c0_15 = arith.constant 0 : index
      %c0_16 = arith.constant 0 : index
      %16 = vector.load %arg4[%c0_15, %c0_16] : memref<1x4xf32, #tpu.memory_space<vmem>>, vector<1x4xf32>
      %17 = arith.addf %15, %16 : vector<1x4xf32>
      %cst_17 = arith.constant 0.000000e+00 : f32
      %18 = vector.broadcast %cst_17 : f32 to vector<1x4xf32>
      %19 = arith.maximumf %17, %18 : vector<1x4xf32>
      %c0_18 = arith.constant 0 : index
      %c0_19 = arith.constant 0 : index
      %20 = vector.load %arg5[%c0_18, %c0_19] : memref<4x64xf32, #tpu.memory_space<vmem>>, vector<4x64xf32>
      %cst_20 = arith.constant dense<0.000000e+00> : vector<1x64xf32>
      %21 = tpu.matmul %19, %20, %cst_20 {dimension_numbers = #tpu.dot_dimension_numbers<[1], [0], [0], [1], [0, 0, 1, 1], [], []>} : vector<1x4xf32>, vector<4x64xf32>, vector<1x64xf32> -> vector<1x64xf32>
      %c0_21 = arith.constant 0 : index
      %c0_22 = arith.constant 0 : index
      %22 = vector.load %arg6[%c0_21, %c0_22] : memref<1x64xf32, #tpu.memory_space<vmem>>, vector<1x64xf32>
      %23 = arith.addf %21, %22 : vector<1x64xf32>
      %cst_23 = arith.constant 0.000000e+00 : f32
      %24 = vector.broadcast %cst_23 : f32 to vector<1x64xf32>
      %25 = arith.subf %24, %23 : vector<1x64xf32>
      %26 = math.exp %25 : vector<1x64xf32>
      %cst_24 = arith.constant 1.000000e+00 : f32
      %27 = vector.broadcast %cst_24 : f32 to vector<1x64xf32>
      %28 = arith.addf %27, %26 : vector<1x64xf32>
      %cst_25 = arith.constant 1.000000e+00 : f32
      %29 = vector.broadcast %cst_25 : f32 to vector<1x64xf32>
      %30 = arith.divf %29, %28 : vector<1x64xf32>
      %c0_26 = arith.constant 0 : index
      %c0_27 = arith.constant 0 : index
      %c0_28 = arith.constant 0 : index
      %31 = vector.load %arg7[%c0_26, %c0_27, %c0_28] : memref<1x1x64xf32, #tpu.memory_space<vmem>>, vector<1x1x64xf32>
      %32 = vector.shape_cast %31 : vector<1x1x64xf32> to vector<1x64xf32>
      %33 = vector.shape_cast %30 : vector<1x64xf32> to vector<1x1x64xf32>
      tpu.vector_store %arg7[%c0_26, %c0_27, %c0_28], %33 {strides = array<i32>} : memref<1x1x64xf32, #tpu.memory_space<vmem>>, vector<1x1x64xf32>,
    } else {
    }
    return
  }
  func.func @transform_0(%arg0: i32, %arg1: i32) -> (i32, i32, i32) {
    %c0_i32 = arith.constant 0 : i32
    %c0_i32_0 = arith.constant 0 : i32
    return %arg0, %c0_i32, %arg1 : i32, i32, i32
  }
  func.func @transform_1(%arg0: i32, %arg1: i32) -> (i32, i32) {
    %c0_i32 = arith.constant 0 : i32
    %c0_i32_0 = arith.constant 0 : i32
    %c0_i32_1 = arith.constant 0 : i32
    return %c0_i32, %c0_i32_0 : i32, i32
  }
  func.func @transform_2(%arg0: i32, %arg1: i32) -> (i32, i32) {
    %c0_i32 = arith.constant 0 : i32
    %c0_i32_0 = arith.constant 0 : i32
    %c0_i32_1 = arith.constant 0 : i32
    return %c0_i32, %c0_i32_0 : i32, i32
  }
  func.func @transform_3(%arg0: i32, %arg1: i32) -> (i32, i32) {
    %c0_i32 = arith.constant 0 : i32
    %c0_i32_0 = arith.constant 0 : i32
    %c0_i32_1 = arith.constant 0 : i32
    return %c0_i32, %c0_i32_0 : i32, i32
  }
  func.func @transform_4(%arg0: i32, %arg1: i32) -> (i32, i32) {
    %c0_i32 = arith.constant 0 : i32
    %c0_i32_0 = arith.constant 0 : i32
    %c0_i32_1 = arith.constant 0 : i32
    return %c0_i32, %c0_i32_0 : i32, i32
  }
  func.func @transform_5(%arg0: i32, %arg1: i32) -> (i32, i32, i32) {
    %c0_i32 = arith.constant 0 : i32
    %c0_i32_0 = arith.constant 0 : i32
    %c0_i32_1 = arith.constant 0 : i32
    return %arg0, %c0_i32, %c0_i32_0 : i32, i32, i32
  }
}

</mosaic_0001>

<llo_original>
// kernel: tpu_custom_call.1
$region0: #{tpu_custom_call.1}
  #allocation0 [shape = 'u32[]', space=smem, size = 0x4, offset = 0x4, fixed_abs, tag = 'smem constant byte address 0x4 - core index']
  #allocation1 [shape = 'u32[144,128]{1,0:T(1,128)}', space=vmem, size = 0x12000, scoped, tag = 'internal scratch']
  #allocation2 [shape = 'f32[1,64]{1,0:T(1,128)}', space=vmem, size = 0x200, scoped, tag = 'scratch operand']
  %s0 = inlined_call_operand.hbm [shape: f32[2,64,256], index: 0, kind: input, shape index: {}]
  %s1 = inlined_call_operand.vmem [shape: f32[64,4], index: 1, kind: input, shape index: {}]
  %s2 = inlined_call_operand.vmem [shape: f32[1,4], index: 2, kind: input, shape index: {}]
  %s3 = inlined_call_operand.vmem [shape: f32[4,64], index: 3, kind: input, shape index: {}]
  %s4 = inlined_call_operand.vmem [shape: f32[1,64], index: 4, kind: input, shape index: {}]
  %s5 = inlined_call_operand.hbm [shape: f32[2,1,64], index: 5, kind: output, shape index: {}]
  %s6 = sld [smem:[#allocation0]]
  $region65: #{tpu_custom_call.1} parent=0
    _
  %s8 = ssub.s32 1, %s6
  %s9 = scalar_select 0, %s8, %s6
  $region1: #{tpu_custom_call.1} parent=0
    #allocation3 [shape = 'u8[131072]{0}', space=vmem, size = 0x20000, scoped, tag = 'input window, operand 0']
    #allocation4 [shape = 's32[2]{0}', space=sflag, size = 0x8, scoped, tag = 'scoped memory for tpu_custom_call.1']
    #allocation5 [shape = 's32[2]{0}', space=sflag, size = 0x8, scoped, tag = 'scoped memory for tpu_custom_call.1']
    #allocation6 [shape = 'u8[1024]{0}', space=vmem, size = 0x400, scoped, tag = 'output window, operand 0']
    %10 = vsyncpa [#allocation4], 0
    %s11 = scalar_lea.sflag [#allocation4], 1
    %12 = vsyncpa %s11, 0
    %13 = vsyncpa [#allocation5], 0
    %s14 = scalar_lea.sflag [#allocation5], 1
    %15 = vsyncpa %s14, 0
    loop: start=0, step=1, limit=4
    $region2: #{tpu_custom_call.1} parent=1 // loop_pre_header
      _
    $region3: #{tpu_custom_call.1} parent=1 // loop_header
      %s17 = sphi 0, %s21
      %p18 = scmp.ge.s32.totalorder %s17, 4
      %s24 = sphi 0, %s36
      %s25 = sphi 0, %s32
      %s26 = sphi 0, %s24
      %s27 = sphi 0, %s25
      %s28 = sphi 0, %s26
      %s29 = sphi 0, %s27
      %s41 = sphi 0, %s43
      %s44 = sphi 0, %s41
      %s45 = sphi 0, %s44
      %s61 = sphi 0, %s45
      %s65 = sphi 0, %s65
      %s67 = sphi 0, %s65
      %s68 = sphi 0, %s67
      %s82 = sphi 0, %s68
      %s86 = sphi 0, %s86
      %s88 = sphi 0, %s86
      %s89 = sphi 0, %s88
      %s103 = sphi 0, %s89
      %s107 = sphi 0, %s107
      %s109 = sphi 0, %s107
      %s110 = sphi 0, %s109
      %s124 = sphi 0, %s110
      %s128 = sphi 0, %s128
      %s130 = sphi 0, %s128
      %s131 = sphi 0, %s130
      %s145 = sphi 0, %s131
      %s151 = sphi 0, %s153
      %s154 = sphi 0, %s151
      %s155 = sphi 0, %s154
      %s171 = sphi 0, %s155
    $region4: #{tpu_custom_call.1} parent=1 // loop_header_branch
      %20 = sbr.rel (%p18) target = $region8
    $region5: #{tpu_custom_call.1} parent=1 // loop_body
      %s22 = ssub.s32 %s17, 1
      %s23 = ssub.s32 %s17, 2
      %s30 = sadd.s32 1, %s25
      %p31 = scmp.ge.s32.totalorder %s30, 1
      %s32 = scalar_select %p31, 0, %s30
      %s33 = sadd.s32 1, %s24
      %s34 = scalar_select %p31, %s33, %s24
      %p35 = scmp.ge.s32.totalorder %s34, 2
      %s36 = scalar_select %p35, 0, %s34
      %s37 = ssub.s32 %s24, %s36
      %s38 = ssub.s32 %s25, %s32
      %s39 = sor.u32 %s37, %s38
      %p40 = scmp.eq.s32.totalorder %s39, 0
      %s42 = sadd.s32 %s41, 1
      %s43 = scalar_select %p40, %s41, %s42
      %p46 = pneg %p40
      %p47 = scmp.eq.s32.totalorder %s17, 1
      %p48 = por %p46, %p47
      %p49 = scmp.ne.s32.totalorder %s41, %s44
      %p50 = scmp.eq.s32.totalorder %s17, 0
      %p51 = por %p49, %p50
      %p52 = scmp.ne.s32.totalorder %s41, %s44
      %p53 = scmp.eq.s32.totalorder %s22, 1
      %p54 = por %p52, %p53
      %p55 = scmp.ne.s32.totalorder %s44, %s45
      %p56 = scmp.eq.s32.totalorder %s22, 0
      %p57 = por %p55, %p56
      %p58 = scmp.ne.s32.totalorder %s44, %s45
      %p59 = scmp.eq.s32.totalorder %s23, 1
      %p60 = por %p58, %p59
      %p62 = scmp.ne.s32.totalorder %s45, %s61
      %p63 = scmp.eq.s32.totalorder %s23, 0
      %p64 = por %p62, %p63
      %s66 = sadd.s32 %s65, 1
      %p69 = scmp.eq.s32.totalorder %s17, 1
      %p70 = scmp.ne.s32.totalorder %s65, %s67
      %p71 = scmp.eq.s32.totalorder %s17, 0
      %p72 = por %p70, %p71
      %p73 = scmp.ne.s32.totalorder %s65, %s67
      %p74 = scmp.eq.s32.totalorder %s22, 1
      %p75 = por %p73, %p74
      %p76 = scmp.ne.s32.totalorder %s67, %s68
      %p77 = scmp.eq.s32.totalorder %s22, 0
      %p78 = por %p76, %p77
      %p79 = scmp.ne.s32.totalorder %s67, %s68
      %p80 = scmp.eq.s32.totalorder %s23, 1
      %p81 = por %p79, %p80
      %p83 = scmp.ne.s32.totalorder %s68, %s82
      %p84 = scmp.eq.s32.totalorder %s23, 0
      %p85 = por %p83, %p84
      %s87 = sadd.s32 %s86, 1
      %p90 = scmp.eq.s32.totalorder %s17, 1
      %p91 = scmp.ne.s32.totalorder %s86, %s88
      %p92 = scmp.eq.s32.totalorder %s17, 0
      %p93 = por %p91, %p92
      %p94 = scmp.ne.s32.totalorder %s86, %s88
      %p95 = scmp.eq.s32.totalorder %s22, 1
      %p96 = por %p94, %p95
      %p97 = scmp.ne.s32.totalorder %s88, %s89
      %p98 = scmp.eq.s32.totalorder %s22, 0
      %p99 = por %p97, %p98
      %p100 = scmp.ne.s32.totalorder %s88, %s89
      %p101 = scmp.eq.s32.totalorder %s23, 1
      %p102 = por %p100, %p101
      %p104 = scmp.ne.s32.totalorder %s89, %s103
      %p105 = scmp.eq.s32.totalorder %s23, 0
      %p106 = por %p104, %p105
      %s108 = sadd.s32 %s107, 1
      %p111 = scmp.eq.s32.totalorder %s17, 1
      %p112 = scmp.ne.s32.totalorder %s107, %s109
      %p113 = scmp.eq.s32.totalorder %s17, 0
      %p114 = por %p112, %p113
      %p115 = scmp.ne.s32.totalorder %s107, %s109
      %p116 = scmp.eq.s32.totalorder %s22, 1
      %p117 = por %p115, %p116
      %p118 = scmp.ne.s32.totalorder %s109, %s110
      %p119 = scmp.eq.s32.totalorder %s22, 0
      %p120 = por %p118, %p119
      %p121 = scmp.ne.s32.totalorder %s109, %s110
      %p122 = scmp.eq.s32.totalorder %s23, 1
      %p123 = por %p121, %p122
      %p125 = scmp.ne.s32.totalorder %s110, %s124
      %p126 = scmp.eq.s32.totalorder %s23, 0
      %p127 = por %p125, %p126
      %s129 = sadd.s32 %s128, 1
      %p132 = scmp.eq.s32.totalorder %s17, 1
      %p133 = scmp.ne.s32.totalorder %s128, %s130
      %p134 = scmp.eq.s32.totalorder %s17, 0
      %p135 = por %p133, %p134
      %p136 = scmp.ne.s32.totalorder %s128, %s130
      %p137 = scmp.eq.s32.totalorder %s22, 1
      %p138 = por %p136, %p137
      %p139 = scmp.ne.s32.totalorder %s130, %s131
      %p140 = scmp.eq.s32.totalorder %s22, 0
      %p141 = por %p139, %p140
      %p142 = scmp.ne.s32.totalorder %s130, %s131
      %p143 = scmp.eq.s32.totalorder %s23, 1
      %p144 = por %p142, %p143
      %p146 = scmp.ne.s32.totalorder %s131, %s145
      %p147 = scmp.eq.s32.totalorder %s23, 0
      %p148 = por %p146, %p147
      %s149 = ssub.s32 %s24, %s36
      %p150 = scmp.eq.s32.totalorder %s149, 0
      %s152 = sadd.s32 %s151, 1
      %s153 = scalar_select %p150, %s151, %s152
      %p156 = pneg %p150
      %p157 = scmp.eq.s32.totalorder %s17, 1
      %p158 = por %p156, %p157
      %p159 = scmp.ne.s32.totalorder %s151, %s154
      %p160 = scmp.eq.s32.totalorder %s17, 0
      %p161 = por %p159, %p160
      %p162 = scmp.ne.s32.totalorder %s151, %s154
      %p163 = scmp.eq.s32.totalorder %s22, 1
      %p164 = por %p162, %p163
      %p165 = scmp.ne.s32.totalorder %s154, %s155
      %p166 = scmp.eq.s32.totalorder %s22, 0
      %p167 = por %p165, %p166
      %p168 = scmp.ne.s32.totalorder %s154, %s155
      %p169 = scmp.eq.s32.totalorder %s23, 1
      %p170 = por %p168, %p169
      %p172 = scmp.ne.s32.totalorder %s155, %s171
      %p173 = scmp.eq.s32.totalorder %s23, 0
      %p174 = por %p172, %p173
      %p175 = scmp.le.s32.totalorder 1, %s17
      %p176 = scmp.lt.s32.totalorder %s17, 3
      %p177 = pnand %p175, %p176
      %p178 = pneg %p177
      // Predicated region
      $region9: #{tpu_custom_call.1} parent=5 // pred_check
        _
      $region10: #{tpu_custom_call.1} parent=5 // pred_check_branch
        %180 = sbr.rel (%p177) target = $region12
      $region11: #{tpu_custom_call.1} parent=5 // pred_region
        %s181 = ssub.s32 %s17, 1
        // Predicated region
        $region13: #{tpu_custom_call.1} parent=11 // pred_check
          %p182 = pneg %p78
        $region14: #{tpu_custom_call.1} parent=11 // pred_check_branch
          %184 = sbr.rel (%p182) target = $region16
        $region15: #{tpu_custom_call.1} parent=11 // pred_region
          _
        $region16: #{tpu_custom_call.1} parent=11 // pred_fallthru
          _
        // Predicated region
        $region17: #{tpu_custom_call.1} parent=11 // pred_check
          %p185 = pneg %p99
        $region18: #{tpu_custom_call.1} parent=11 // pred_check_branch
          %187 = sbr.rel (%p185) target = $region20
        $region19: #{tpu_custom_call.1} parent=11 // pred_region
          _
        $region20: #{tpu_custom_call.1} parent=11 // pred_fallthru
          _
        // Predicated region
        $region21: #{tpu_custom_call.1} parent=11 // pred_check
          %p188 = pneg %p120
        $region22: #{tpu_custom_call.1} parent=11 // pred_check_branch
          %190 = sbr.rel (%p188) target = $region24
        $region23: #{tpu_custom_call.1} parent=11 // pred_region
          _
        $region24: #{tpu_custom_call.1} parent=11 // pred_fallthru
          _
        // Predicated region
        $region25: #{tpu_custom_call.1} parent=11 // pred_check
          %p191 = pneg %p141
        $region26: #{tpu_custom_call.1} parent=11 // pred_check_branch
          %193 = sbr.rel (%p191) target = $region28
        $region27: #{tpu_custom_call.1} parent=11 // pred_region
          _
        $region28: #{tpu_custom_call.1} parent=11 // pred_fallthru
          _
      $region12: #{tpu_custom_call.1} parent=5 // pred_fallthru
        _
      %p194 = scmp.lt.s32.totalorder %s17, 2
      // Predicated region
      $region29: #{tpu_custom_call.1} parent=5 // pred_check
        %p195 = pneg %p194
      $region30: #{tpu_custom_call.1} parent=5 // pred_check_branch
        %197 = sbr.rel (%p195) target = $region32
      $region31: #{tpu_custom_call.1} parent=5 // pred_region
        // Predicated region
        $region33: #{tpu_custom_call.1} parent=31 // pred_check
          %p198 = pneg %p51
        $region34: #{tpu_custom_call.1} parent=31 // pred_check_branch
          %200 = sbr.rel (%p198) target = $region36
        $region35: #{tpu_custom_call.1} parent=31 // pred_region
          %s201 = sand.u32 %s41, 1
          %s202 = scalar_lea.sflag [#allocation4], %s201
          %s203 = sand.u32 %s41, 1
          %s204 = smul.addr %s203, 128
          %s205 = scalar_lea.vmem [#allocation3], %s204
          %s206 = smul.u32 2, %s25
          %s208 = ssub.s32 2048, 2048
          %209 = vsyncadd %s202, %s208
          %s210 = smul.addr %s24, 16
          %s211 = sadd.s32 %s206, %s210
          %s212 = smul.addr %s211, 128
          %s213 = scalar_lea.hbm %s0, %s212
          %s214 = sshll.u32 %s205, 4
          %s215 = int_to_ptr.vmem [resolvable:$true] %s214
          %220 = dma.hbm_to_vmem [thread:$0]  %s213, 2048, %s215, %s202, 256, 256, 16
        $region36: #{tpu_custom_call.1} parent=31 // pred_fallthru
          _
      $region32: #{tpu_custom_call.1} parent=5 // pred_fallthru
        _
      %p221 = scmp.le.s32.totalorder 1, %s17
      %p222 = scmp.lt.s32.totalorder %s17, 3
      %p223 = pnand %p221, %p222
      %p224 = pneg %p223
      // Predicated region
      $region37: #{tpu_custom_call.1} parent=5 // pred_check
        _
      $region38: #{tpu_custom_call.1} parent=5 // pred_check_branch
        %226 = sbr.rel (%p223) target = $region40
      $region39: #{tpu_custom_call.1} parent=5 // pred_region
        %s227 = ssub.s32 %s17, 1
        %s228 = sand.u32 %s44, 1
        %s229 = scalar_lea.sflag [#allocation4], %s228
        %s230 = sand.u32 %s44, 1
        %s231 = smul.addr %s230, 128
        %s232 = scalar_lea.vmem [#allocation3], %s231
        // Predicated region
        $region41: #{tpu_custom_call.1} parent=39 // pred_check
          %p233 = pneg %p57
        $region42: #{tpu_custom_call.1} parent=39 // pred_check_branch
          %235 = sbr.rel (%p233) target = $region44
        $region43: #{tpu_custom_call.1} parent=39 // pred_region
          %236 = dma.done %s229, 2048
        $region44: #{tpu_custom_call.1} parent=39 // pred_fallthru
          _
        %s237 = sand.u32 %s44, 1
        %s238 = scalar_lea.sflag [#allocation4], %s237
        %s239 = sand.u32 %s44, 1
        %s240 = smul.addr %s239, 128
        %s241 = scalar_lea.vmem [#allocation3], %s240
        %p242 = pneg %p57
        %p243 = pneg %p54
        %p244 = pneg %p78
        %p245 = pneg %p75
        %p246 = pneg %p99
        %p247 = pneg %p96
        %p248 = pneg %p120
        %p249 = pneg %p117
        %p250 = pneg %p141
        %p251 = pneg %p138
        %p252 = pneg %p167
        %p253 = pneg %p164
        %s254 = sand.u32 %s154, 1
        %s255 = scalar_lea.sflag [#allocation5], %s254
        %s256 = sand.u32 %s154, 1
        %s257 = scalar_lea.vmem [#allocation6], %s256
        %s258 = smul.u32 2, %s27
        %p259 = scmp.eq.s32.totalorder %s27, 0
        // Predicated region
        $region45: #{tpu_custom_call.1} parent=39 // pred_check
          %p260 = pneg %p259
        $region46: #{tpu_custom_call.1} parent=39 // pred_check_branch
          %262 = sbr.rel (%p260) target = $region48
        $region47: #{tpu_custom_call.1} parent=39 // pred_region
          %vm263 = vcmask 516096
          %264 = vst.msk [vmem:[#allocation2] sm:$0x1] %vm263, 0.0
        $region48: #{tpu_custom_call.1} parent=39 // pred_fallthru
          _
        %v265 = vld [vmem:[#allocation2] sm:$0x1]
        %v266 = vld [vmem:[%s232] sm:$0xff]
        %v267 = vld [vmem:[%s232 + $0x8] sm:$0xff]
        %v268 = vld [vmem:[%s232 + $0x10] sm:$0xff]
        %v269 = vld [vmem:[%s232 + $0x18] sm:$0xff]
        %v270 = vld [vmem:[%s232 + $0x20] sm:$0xff]
        %v271 = vld [vmem:[%s232 + $0x28] sm:$0xff]
        %v272 = vld [vmem:[%s232 + $0x30] sm:$0xff]
        %v273 = vld [vmem:[%s232 + $0x38] sm:$0xff]
        %v274 = vld [vmem:[%s232 + $0x40] sm:$0xff]
        %v275 = vld [vmem:[%s232 + $0x48] sm:$0xff]
        %v276 = vld [vmem:[%s232 + $0x50] sm:$0xff]
        %v277 = vld [vmem:[%s232 + $0x58] sm:$0xff]
        %v278 = vld [vmem:[%s232 + $0x60] sm:$0xff]
        %v279 = vld [vmem:[%s232 + $0x68] sm:$0xff]
        %v280 = vld [vmem:[%s232 + $0x70] sm:$0xff]
        %v281 = vld [vmem:[%s232 + $0x78] sm:$0xff]
        %v282 = vadd.f32 %v266, %v267
        %283 = vadd.xlane.f32.xlu0 %v282
        %v284 = vpop.xlane.xlu0 %283
        %v285 = vadd.f32 %v268, %v269
        %286 = vadd.xlane.f32.xlu0 %v285
        %v287 = vpop.xlane.xlu0 %286
        %v288 = vadd.f32 %v270, %v271
        %289 = vadd.xlane.f32.xlu0 %v288
        %v290 = vpop.xlane.xlu0 %289
        %v291 = vadd.f32 %v272, %v273
        %292 = vadd.xlane.f32.xlu0 %v291
        %v293 = vpop.xlane.xlu0 %292
        %v294 = vadd.f32 %v274, %v275
        %295 = vadd.xlane.f32.xlu0 %v294
        %v296 = vpop.xlane.xlu0 %295
        %v297 = vadd.f32 %v276, %v277
        %298 = vadd.xlane.f32.xlu0 %v297
        %v299 = vpop.xlane.xlu0 %298
        %v300 = vadd.f32 %v278, %v279
        %301 = vadd.xlane.f32.xlu0 %v300
        %v302 = vpop.xlane.xlu0 %301
        %v303 = vadd.f32 %v280, %v281
        %304 = vadd.xlane.f32.xlu0 %v303
        %v305 = vpop.xlane.xlu0 %304
        %v314 = vlaneseq
        %v315 = vshrl.u32 %v314, 7
        %v316 = vsub.s32 0, %v315
        %v317 = vrot.slane %v284, %v316
        %v318 = vlaneseq
        %v319 = vshrl.u32 %v318, 7
        %v320 = vsub.s32 1, %v319
        %v321 = vrot.slane %v284, %v320
        %v322 = vlaneseq
        %v323 = vshrl.u32 %v322, 7
        %v324 = vsub.s32 2, %v323
        %v325 = vrot.slane %v284, %v324
        %v326 = vlaneseq
        %v327 = vshrl.u32 %v326, 7
        %v328 = vsub.s32 3, %v327
        %v329 = vrot.slane %v284, %v328
        %v330 = vlaneseq
        %v331 = vshrl.u32 %v330, 7
        %v332 = vsub.s32 4, %v331
        %v333 = vrot.slane %v284, %v332
        %v334 = vlaneseq
        %v335 = vshrl.u32 %v334, 7
        %v336 = vsub.s32 5, %v335
        %v337 = vrot.slane %v284, %v336
        %v338 = vlaneseq
        %v339 = vshrl.u32 %v338, 7
        %v340 = vsub.s32 6, %v339
        %v341 = vrot.slane %v284, %v340
        %v342 = vlaneseq
        %v343 = vshrl.u32 %v342, 7
        %v344 = vsub.s32 7, %v343
        %v345 = vrot.slane %v284, %v344
        %v346 = vlaneseq
        %v347 = vshrl.u32 %v346, 7
        %v348 = vsub.s32 0, %v347
        %v349 = vrot.slane %v287, %v348
        %v350 = vlaneseq
        %v351 = vshrl.u32 %v350, 7
        %v352 = vsub.s32 1, %v351
        %v353 = vrot.slane %v287, %v352
        %v354 = vlaneseq
        %v355 = vshrl.u32 %v354, 7
        %v356 = vsub.s32 2, %v355
        %v357 = vrot.slane %v287, %v356
        %v358 = vlaneseq
        %v359 = vshrl.u32 %v358, 7
        %v360 = vsub.s32 3, %v359
        %v361 = vrot.slane %v287, %v360
        %v362 = vlaneseq
        %v363 = vshrl.u32 %v362, 7
        %v364 = vsub.s32 4, %v363
        %v365 = vrot.slane %v287, %v364
        %v366 = vlaneseq
        %v367 = vshrl.u32 %v366, 7
        %v368 = vsub.s32 5, %v367
        %v369 = vrot.slane %v287, %v368
        %v370 = vlaneseq
        %v371 = vshrl.u32 %v370, 7
        %v372 = vsub.s32 6, %v371
        %v373 = vrot.slane %v287, %v372
        %v374 = vlaneseq
        %v375 = vshrl.u32 %v374, 7
        %v376 = vsub.s32 7, %v375
        %v377 = vrot.slane %v287, %v376
        %v378 = vlaneseq
        %v379 = vshrl.u32 %v378, 7
        %v380 = vsub.s32 0, %v379
        %v381 = vrot.slane %v290, %v380
        %v382 = vlaneseq
        %v383 = vshrl.u32 %v382, 7
        %v384 = vsub.s32 1, %v383
        %v385 = vrot.slane %v290, %v384
        %v386 = vlaneseq
        %v387 = vshrl.u32 %v386, 7
        %v388 = vsub.s32 2, %v387
        %v389 = vrot.slane %v290, %v388
        %v390 = vlaneseq
        %v391 = vshrl.u32 %v390, 7
        %v392 = vsub.s32 3, %v391
        %v393 = vrot.slane %v290, %v392
        %v394 = vlaneseq
        %v395 = vshrl.u32 %v394, 7
        %v396 = vsub.s32 4, %v395
        %v397 = vrot.slane %v290, %v396
        %v398 = vlaneseq
        %v399 = vshrl.u32 %v398, 7
        %v400 = vsub.s32 5, %v399
        %v401 = vrot.slane %v290, %v400
        %v402 = vlaneseq
        %v403 = vshrl.u32 %v402, 7
        %v404 = vsub.s32 6, %v403
        %v405 = vrot.slane %v290, %v404
        %v406 = vlaneseq
        %v407 = vshrl.u32 %v406, 7
        %v408 = vsub.s32 7, %v407
        %v409 = vrot.slane %v290, %v408
        %v410 = vlaneseq
        %v411 = vshrl.u32 %v410, 7
        %v412 = vsub.s32 0, %v411
        %v413 = vrot.slane %v293, %v412
        %v414 = vlaneseq
        %v415 = vshrl.u32 %v414, 7
        %v416 = vsub.s32 1, %v415
        %v417 = vrot.slane %v293, %v416
        %v418 = vlaneseq
        %v419 = vshrl.u32 %v418, 7
        %v420 = vsub.s32 2, %v419
        %v421 = vrot.slane %v293, %v420
        %v422 = vlaneseq
        %v423 = vshrl.u32 %v422, 7
        %v424 = vsub.s32 3, %v423
        %v425 = vrot.slane %v293, %v424
        %v426 = vlaneseq
        %v427 = vshrl.u32 %v426, 7
        %v428 = vsub.s32 4, %v427
        %v429 = vrot.slane %v293, %v428
        %v430 = vlaneseq
        %v431 = vshrl.u32 %v430, 7
        %v432 = vsub.s32 5, %v431
        %v433 = vrot.slane %v293, %v432
        %v434 = vlaneseq
        %v435 = vshrl.u32 %v434, 7
        %v436 = vsub.s32 6, %v435
        %v437 = vrot.slane %v293, %v436
        %v438 = vlaneseq
        %v439 = vshrl.u32 %v438, 7
        %v440 = vsub.s32 7, %v439
        %v441 = vrot.slane %v293, %v440
        %v442 = vlaneseq
        %v443 = vshrl.u32 %v442, 7
        %v444 = vsub.s32 0, %v443
        %v445 = vrot.slane %v296, %v444
        %v446 = vlaneseq
        %v447 = vshrl.u32 %v446, 7
        %v448 = vsub.s32 1, %v447
        %v449 = vrot.slane %v296, %v448
        %v450 = vlaneseq
        %v451 = vshrl.u32 %v450, 7
        %v452 = vsub.s32 2, %v451
        %v453 = vrot.slane %v296, %v452
        %v454 = vlaneseq
        %v455 = vshrl.u32 %v454, 7
        %v456 = vsub.s32 3, %v455
        %v457 = vrot.slane %v296, %v456
        %v458 = vlaneseq
        %v459 = vshrl.u32 %v458, 7
        %v460 = vsub.s32 4, %v459
        %v461 = vrot.slane %v296, %v460
        %v462 = vlaneseq
        %v463 = vshrl.u32 %v462, 7
        %v464 = vsub.s32 5, %v463
        %v465 = vrot.slane %v296, %v464
        %v466 = vlaneseq
        %v467 = vshrl.u32 %v466, 7
        %v468 = vsub.s32 6, %v467
        %v469 = vrot.slane %v296, %v468
        %v470 = vlaneseq
        %v471 = vshrl.u32 %v470, 7
        %v472 = vsub.s32 7, %v471
        %v473 = vrot.slane %v296, %v472
        %v474 = vlaneseq
        %v475 = vshrl.u32 %v474, 7
        %v476 = vsub.s32 0, %v475
        %v477 = vrot.slane %v299, %v476
        %v478 = vlaneseq
        %v479 = vshrl.u32 %v478, 7
        %v480 = vsub.s32 1, %v479
        %v481 = vrot.slane %v299, %v480
        %v482 = vlaneseq
        %v483 = vshrl.u32 %v482, 7
        %v484 = vsub.s32 2, %v483
        %v485 = vrot.slane %v299, %v484
        %v486 = vlaneseq
        %v487 = vshrl.u32 %v486, 7
        %v488 = vsub.s32 3, %v487
        %v489 = vrot.slane %v299, %v488
        %v490 = vlaneseq
        %v491 = vshrl.u32 %v490, 7
        %v492 = vsub.s32 4, %v491
        %v493 = vrot.slane %v299, %v492
        %v494 = vlaneseq
        %v495 = vshrl.u32 %v494, 7
        %v496 = vsub.s32 5, %v495
        %v497 = vrot.slane %v299, %v496
        %v498 = vlaneseq
        %v499 = vshrl.u32 %v498, 7
        %v500 = vsub.s32 6, %v499
        %v501 = vrot.slane %v299, %v500
        %v502 = vlaneseq
        %v503 = vshrl.u32 %v502, 7
        %v504 = vsub.s32 7, %v503
        %v505 = vrot.slane %v299, %v504
        %v506 = vlaneseq
        %v507 = vshrl.u32 %v506, 7
        %v508 = vsub.s32 0, %v507
        %v509 = vrot.slane %v302, %v508
        %v510 = vlaneseq
        %v511 = vshrl.u32 %v510, 7
        %v512 = vsub.s32 1, %v511
        %v513 = vrot.slane %v302, %v512
        %v514 = vlaneseq
        %v515 = vshrl.u32 %v514, 7
        %v516 = vsub.s32 2, %v515
        %v517 = vrot.slane %v302, %v516
        %v518 = vlaneseq
        %v519 = vshrl.u32 %v518, 7
        %v520 = vsub.s32 3, %v519
        %v521 = vrot.slane %v302, %v520
        %v522 = vlaneseq
        %v523 = vshrl.u32 %v522, 7
        %v524 = vsub.s32 4, %v523
        %v525 = vrot.slane %v302, %v524
        %v526 = vlaneseq
        %v527 = vshrl.u32 %v526, 7
        %v528 = vsub.s32 5, %v527
        %v529 = vrot.slane %v302, %v528
        %v530 = vlaneseq
        %v531 = vshrl.u32 %v530, 7
        %v532 = vsub.s32 6, %v531
        %v533 = vrot.slane %v302, %v532
        %v534 = vlaneseq
        %v535 = vshrl.u32 %v534, 7
        %v536 = vsub.s32 7, %v535
        %v537 = vrot.slane %v302, %v536
        %v538 = vlaneseq
        %v539 = vshrl.u32 %v538, 7
        %v540 = vsub.s32 0, %v539
        %v541 = vrot.slane %v305, %v540
        %v542 = vlaneseq
        %v543 = vshrl.u32 %v542, 7
        %v544 = vsub.s32 1, %v543
        %v545 = vrot.slane %v305, %v544
        %v546 = vlaneseq
        %v547 = vshrl.u32 %v546, 7
        %v548 = vsub.s32 2, %v547
        %v549 = vrot.slane %v305, %v548
        %v550 = vlaneseq
        %v551 = vshrl.u32 %v550, 7
        %v552 = vsub.s32 3, %v551
        %v553 = vrot.slane %v305, %v552
        %v554 = vlaneseq
        %v555 = vshrl.u32 %v554, 7
        %v556 = vsub.s32 4, %v555
        %v557 = vrot.slane %v305, %v556
        %v558 = vlaneseq
        %v559 = vshrl.u32 %v558, 7
        %v560 = vsub.s32 5, %v559
        %v561 = vrot.slane %v305, %v560
        %v562 = vlaneseq
        %v563 = vshrl.u32 %v562, 7
        %v564 = vsub.s32 6, %v563
        %v565 = vrot.slane %v305, %v564
        %v566 = vlaneseq
        %v567 = vshrl.u32 %v566, 7
        %v568 = vsub.s32 7, %v567
        %v569 = vrot.slane %v305, %v568
        %v570 = vcombine.low %v317, %v321
        %v571 = vcombine.low %v325, %v329
        %v572 = vcombine.low %v333, %v337
        %v573 = vcombine.low %v341, %v345
        %v575 = vunpack.c.l.s4 1966171168
        %v576 = vunpack.c.0.s8 %v575
        %v577 = vlaneseq
        %v578 = vshrl.u32 %v577, 7
        %v579 = vsub.s32 %v576, %v578
        %v580 = vrot.slane %v570, %v579
        %v582 = vunpack.c.l.s4 1966171168
        %v583 = vunpack.c.0.s8 %v582
        %v584 = vlaneseq
        %v585 = vshrl.u32 %v584, 7
        %v586 = vsub.s32 %v583, %v585
        %v587 = vrot.slane %v571, %v586
        %v589 = vunpack.c.l.s4 1966171168
        %v590 = vunpack.c.0.s8 %v589
        %v591 = vlaneseq
        %v592 = vshrl.u32 %v591, 7
        %v593 = vsub.s32 %v590, %v592
        %v594 = vrot.slane %v572, %v593
        %v596 = vunpack.c.l.s4 1966171168
        %v597 = vunpack.c.0.s8 %v596
        %v598 = vlaneseq
        %v599 = vshrl.u32 %v598, 7
        %v600 = vsub.s32 %v597, %v599
        %v601 = vrot.slane %v573, %v600
        %v602 = vcombine.low %v580, %v587
        %v603 = vcombine.low %v594, %v601
        %v605 = vunpack.c.l.s4 1966171168
        %v606 = vunpack.c.0.s8 %v605
        %v607 = vlaneseq
        %v608 = vshrl.u32 %v607, 7
        %v609 = vsub.s32 %v606, %v608
        %v610 = vrot.slane %v602, %v609
        %v612 = vunpack.c.l.s4 1966171168
        %v613 = vunpack.c.0.s8 %v612
        %v614 = vlaneseq
        %v615 = vshrl.u32 %v614, 7
        %v616 = vsub.s32 %v613, %v615
        %v617 = vrot.slane %v603, %v616
        %v618 = vcombine.low %v610, %v617
        %v619 = vcombine.low %v349, %v353
        %v620 = vcombine.low %v357, %v361
        %v621 = vcombine.low %v365, %v369
        %v622 = vcombine.low %v373, %v377
        %v624 = vunpack.c.l.s4 1966171168
        %v625 = vunpack.c.0.s8 %v624
        %v626 = vlaneseq
        %v627 = vshrl.u32 %v626, 7
        %v628 = vsub.s32 %v625, %v627
        %v629 = vrot.slane %v619, %v628
        %v631 = vunpack.c.l.s4 1966171168
        %v632 = vunpack.c.0.s8 %v631
        %v633 = vlaneseq
        %v634 = vshrl.u32 %v633, 7
        %v635 = vsub.s32 %v632, %v634
        %v636 = vrot.slane %v620, %v635
        %v638 = vunpack.c.l.s4 1966171168
        %v639 = vunpack.c.0.s8 %v638
        %v640 = vlaneseq
        %v641 = vshrl.u32 %v640, 7
        %v642 = vsub.s32 %v639, %v641
        %v643 = vrot.slane %v621, %v642
        %v645 = vunpack.c.l.s4 1966171168
        %v646 = vunpack.c.0.s8 %v645
        %v647 = vlaneseq
        %v648 = vshrl.u32 %v647, 7
        %v649 = vsub.s32 %v646, %v648
        %v650 = vrot.slane %v622, %v649
        %v651 = vcombine.low %v629, %v636
        %v652 = vcombine.low %v643, %v650
        %v654 = vunpack.c.l.s4 1966171168
        %v655 = vunpack.c.0.s8 %v654
        %v656 = vlaneseq
        %v657 = vshrl.u32 %v656, 7
        %v658 = vsub.s32 %v655, %v657
        %v659 = vrot.slane %v651, %v658
        %v661 = vunpack.c.l.s4 1966171168
        %v662 = vunpack.c.0.s8 %v661
        %v663 = vlaneseq
        %v664 = vshrl.u32 %v663, 7
        %v665 = vsub.s32 %v662, %v664
        %v666 = vrot.slane %v652, %v665
        %v667 = vcombine.low %v659, %v666
        %v668 = vcombine.low %v381, %v385
        %v669 = vcombine.low %v389, %v393
        %v670 = vcombine.low %v397, %v401
        %v671 = vcombine.low %v405, %v409
        %v673 = vunpack.c.l.s4 1966171168
        %v674 = vunpack.c.0.s8 %v673
        %v675 = vlaneseq
        %v676 = vshrl.u32 %v675, 7
        %v677 = vsub.s32 %v674, %v676
        %v678 = vrot.slane %v668, %v677
        %v680 = vunpack.c.l.s4 1966171168
        %v681 = vunpack.c.0.s8 %v680
        %v682 = vlaneseq
        %v683 = vshrl.u32 %v682, 7
        %v684 = vsub.s32 %v681, %v683
        %v685 = vrot.slane %v669, %v684
        %v687 = vunpack.c.l.s4 1966171168
        %v688 = vunpack.c.0.s8 %v687
        %v689 = vlaneseq
        %v690 = vshrl.u32 %v689, 7
        %v691 = vsub.s32 %v688, %v690
        %v692 = vrot.slane %v670, %v691
        %v694 = vunpack.c.l.s4 1966171168
        %v695 = vunpack.c.0.s8 %v694
        %v696 = vlaneseq
        %v697 = vshrl.u32 %v696, 7
        %v698 = vsub.s32 %v695, %v697
        %v699 = vrot.slane %v671, %v698
        %v700 = vcombine.low %v678, %v685
        %v701 = vcombine.low %v692, %v699
        %v703 = vunpack.c.l.s4 1966171168
        %v704 = vunpack.c.0.s8 %v703
        %v705 = vlaneseq
        %v706 = vshrl.u32 %v705, 7
        %v707 = vsub.s32 %v704, %v706
        %v708 = vrot.slane %v700, %v707
        %v710 = vunpack.c.l.s4 1966171168
        %v711 = vunpack.c.0.s8 %v710
        %v712 = vlaneseq
        %v713 = vshrl.u32 %v712, 7
        %v714 = vsub.s32 %v711, %v713
        %v715 = vrot.slane %v701, %v714
        %v716 = vcombine.low %v708, %v715
        %v717 = vcombine.low %v413, %v417
        %v718 = vcombine.low %v421, %v425
        %v719 = vcombine.low %v429, %v433
        %v720 = vcombine.low %v437, %v441
        %v722 = vunpack.c.l.s4 1966171168
        %v723 = vunpack.c.0.s8 %v722
        %v724 = vlaneseq
        %v725 = vshrl.u32 %v724, 7
        %v726 = vsub.s32 %v723, %v725
        %v727 = vrot.slane %v717, %v726
        %v729 = vunpack.c.l.s4 1966171168
        %v730 = vunpack.c.0.s8 %v729
        %v731 = vlaneseq
        %v732 = vshrl.u32 %v731, 7
        %v733 = vsub.s32 %v730, %v732
        %v734 = vrot.slane %v718, %v733
        %v736 = vunpack.c.l.s4 1966171168
        %v737 = vunpack.c.0.s8 %v736
        %v738 = vlaneseq
        %v739 = vshrl.u32 %v738, 7
        %v740 = vsub.s32 %v737, %v739
        %v741 = vrot.slane %v719, %v740
        %v743 = vunpack.c.l.s4 1966171168
        %v744 = vunpack.c.0.s8 %v743
        %v745 = vlaneseq
        %v746 = vshrl.u32 %v745, 7
        %v747 = vsub.s32 %v744, %v746
        %v748 = vrot.slane %v720, %v747
        %v749 = vcombine.low %v727, %v734
        %v750 = vcombine.low %v741, %v748
        %v752 = vunpack.c.l.s4 1966171168
        %v753 = vunpack.c.0.s8 %v752
        %v754 = vlaneseq
        %v755 = vshrl.u32 %v754, 7
        %v756 = vsub.s32 %v753, %v755
        %v757 = vrot.slane %v749, %v756
        %v759 = vunpack.c.l.s4 1966171168
        %v760 = vunpack.c.0.s8 %v759
        %v761 = vlaneseq
        %v762 = vshrl.u32 %v761, 7
        %v763 = vsub.s32 %v760, %v762
        %v764 = vrot.slane %v750, %v763
        %v765 = vcombine.low %v757, %v764
        %v766 = vcombine.low %v445, %v449
        %v767 = vcombine.low %v453, %v457
        %v768 = vcombine.low %v461, %v465
        %v769 = vcombine.low %v469, %v473
        %v771 = vunpack.c.l.s4 1966171168
        %v772 = vunpack.c.0.s8 %v771
        %v773 = vlaneseq
        %v774 = vshrl.u32 %v773, 7
        %v775 = vsub.s32 %v772, %v774
        %v776 = vrot.slane %v766, %v775
        %v778 = vunpack.c.l.s4 1966171168
        %v779 = vunpack.c.0.s8 %v778
        %v780 = vlaneseq
        %v781 = vshrl.u32 %v780, 7
        %v782 = vsub.s32 %v779, %v781
        %v783 = vrot.slane %v767, %v782
        %v785 = vunpack.c.l.s4 1966171168
        %v786 = vunpack.c.0.s8 %v785
        %v787 = vlaneseq
        %v788 = vshrl.u32 %v787, 7
        %v789 = vsub.s32 %v786, %v788
        %v790 = vrot.slane %v768, %v789
        %v792 = vunpack.c.l.s4 1966171168
        %v793 = vunpack.c.0.s8 %v792
        %v794 = vlaneseq
        %v795 = vshrl.u32 %v794, 7
        %v796 = vsub.s32 %v793, %v795
        %v797 = vrot.slane %v769, %v796
        %v798 = vcombine.low %v776, %v783
        %v799 = vcombine.low %v790, %v797
        %v801 = vunpack.c.l.s4 1966171168
        %v802 = vunpack.c.0.s8 %v801
        %v803 = vlaneseq
        %v804 = vshrl.u32 %v803, 7
        %v805 = vsub.s32 %v802, %v804
        %v806 = vrot.slane %v798, %v805
        %v808 = vunpack.c.l.s4 1966171168
        %v809 = vunpack.c.0.s8 %v808
        %v810 = vlaneseq
        %v811 = vshrl.u32 %v810, 7
        %v812 = vsub.s32 %v809, %v811
        %v813 = vrot.slane %v799, %v812
        %v814 = vcombine.low %v806, %v813
        %v815 = vcombine.low %v477, %v481
        %v816 = vcombine.low %v485, %v489
        %v817 = vcombine.low %v493, %v497
        %v818 = vcombine.low %v501, %v505
        %v820 = vunpack.c.l.s4 1966171168
        %v821 = vunpack.c.0.s8 %v820
        %v822 = vlaneseq
        %v823 = vshrl.u32 %v822, 7
        %v824 = vsub.s32 %v821, %v823
        %v825 = vrot.slane %v815, %v824
        %v827 = vunpack.c.l.s4 1966171168
        %v828 = vunpack.c.0.s8 %v827
        %v829 = vlaneseq
        %v830 = vshrl.u32 %v829, 7
        %v831 = vsub.s32 %v828, %v830
        %v832 = vrot.slane %v816, %v831
        %v834 = vunpack.c.l.s4 1966171168
        %v835 = vunpack.c.0.s8 %v834
        %v836 = vlaneseq
        %v837 = vshrl.u32 %v836, 7
        %v838 = vsub.s32 %v835, %v837
        %v839 = vrot.slane %v817, %v838
        %v841 = vunpack.c.l.s4 1966171168
        %v842 = vunpack.c.0.s8 %v841
        %v843 = vlaneseq
        %v844 = vshrl.u32 %v843, 7
        %v845 = vsub.s32 %v842, %v844
        %v846 = vrot.slane %v818, %v845
        %v847 = vcombine.low %v825, %v832
        %v848 = vcombine.low %v839, %v846
        %v850 = vunpack.c.l.s4 1966171168
        %v851 = vunpack.c.0.s8 %v850
        %v852 = vlaneseq
        %v853 = vshrl.u32 %v852, 7
        %v854 = vsub.s32 %v851, %v853
        %v855 = vrot.slane %v847, %v854
        %v857 = vunpack.c.l.s4 1966171168
        %v858 = vunpack.c.0.s8 %v857
        %v859 = vlaneseq
        %v860 = vshrl.u32 %v859, 7
        %v861 = vsub.s32 %v858, %v860
        %v862 = vrot.slane %v848, %v861
        %v863 = vcombine.low %v855, %v862
        %v864 = vcombine.low %v509, %v513
        %v865 = vcombine.low %v517, %v521
        %v866 = vcombine.low %v525, %v529
        %v867 = vcombine.low %v533, %v537
        %v869 = vunpack.c.l.s4 1966171168
        %v870 = vunpack.c.0.s8 %v869
        %v871 = vlaneseq
        %v872 = vshrl.u32 %v871, 7
        %v873 = vsub.s32 %v870, %v872
        %v874 = vrot.slane %v864, %v873
        %v876 = vunpack.c.l.s4 1966171168
        %v877 = vunpack.c.0.s8 %v876
        %v878 = vlaneseq
        %v879 = vshrl.u32 %v878, 7
        %v880 = vsub.s32 %v877, %v879
        %v881 = vrot.slane %v865, %v880
        %v883 = vunpack.c.l.s4 1966171168
        %v884 = vunpack.c.0.s8 %v883
        %v885 = vlaneseq
        %v886 = vshrl.u32 %v885, 7
        %v887 = vsub.s32 %v884, %v886
        %v888 = vrot.slane %v866, %v887
        %v890 = vunpack.c.l.s4 1966171168
        %v891 = vunpack.c.0.s8 %v890
        %v892 = vlaneseq
        %v893 = vshrl.u32 %v892, 7
        %v894 = vsub.s32 %v891, %v893
        %v895 = vrot.slane %v867, %v894
        %v896 = vcombine.low %v874, %v881
        %v897 = vcombine.low %v888, %v895
        %v899 = vunpack.c.l.s4 1966171168
        %v900 = vunpack.c.0.s8 %v899
        %v901 = vlaneseq
        %v902 = vshrl.u32 %v901, 7
        %v903 = vsub.s32 %v900, %v902
        %v904 = vrot.slane %v896, %v903
        %v906 = vunpack.c.l.s4 1966171168
        %v907 = vunpack.c.0.s8 %v906
        %v908 = vlaneseq
        %v909 = vshrl.u32 %v908, 7
        %v910 = vsub.s32 %v907, %v909
        %v911 = vrot.slane %v897, %v910
        %v912 = vcombine.low %v904, %v911
        %v913 = vcombine.low %v541, %v545
        %v914 = vcombine.low %v549, %v553
        %v915 = vcombine.low %v557, %v561
        %v916 = vcombine.low %v565, %v569
        %v918 = vunpack.c.l.s4 1966171168
        %v919 = vunpack.c.0.s8 %v918
        %v920 = vlaneseq
        %v921 = vshrl.u32 %v920, 7
        %v922 = vsub.s32 %v919, %v921
        %v923 = vrot.slane %v913, %v922
        %v925 = vunpack.c.l.s4 1966171168
        %v926 = vunpack.c.0.s8 %v925
        %v927 = vlaneseq
        %v928 = vshrl.u32 %v927, 7
        %v929 = vsub.s32 %v926, %v928
        %v930 = vrot.slane %v914, %v929
        %v932 = vunpack.c.l.s4 1966171168
        %v933 = vunpack.c.0.s8 %v932
        %v934 = vlaneseq
        %v935 = vshrl.u32 %v934, 7
        %v936 = vsub.s32 %v933, %v935
        %v937 = vrot.slane %v915, %v936
        %v939 = vunpack.c.l.s4 1966171168
        %v940 = vunpack.c.0.s8 %v939
        %v941 = vlaneseq
        %v942 = vshrl.u32 %v941, 7
        %v943 = vsub.s32 %v940, %v942
        %v944 = vrot.slane %v916, %v943
        %v945 = vcombine.low %v923, %v930
        %v946 = vcombine.low %v937, %v944
        %v948 = vunpack.c.l.s4 1966171168
        %v949 = vunpack.c.0.s8 %v948
        %v950 = vlaneseq
        %v951 = vshrl.u32 %v950, 7
        %v952 = vsub.s32 %v949, %v951
        %v953 = vrot.slane %v945, %v952
        %v955 = vunpack.c.l.s4 1966171168
        %v956 = vunpack.c.0.s8 %v955
        %v957 = vlaneseq
        %v958 = vshrl.u32 %v957, 7
        %v959 = vsub.s32 %v956, %v958
        %v960 = vrot.slane %v946, %v959
        %v961 = vcombine.low %v953, %v960
        %962 = vset.pattern.permute.xlu0 0
        %963 = vperm.xlu0 %962, %v618
        %v964 = vpop.permute.xlu0 %963
        %965 = vset.pattern.permute.xlu0 0
        %966 = vperm.xlu0 %965, %v667
        %v967 = vpop.permute.xlu0 %966
        %968 = vset.pattern.permute.xlu0 0
        %969 = vperm.xlu0 %968, %v716
        %v970 = vpop.permute.xlu0 %969
        %971 = vset.pattern.permute.xlu0 0
        %972 = vperm.xlu0 %971, %v765
        %v973 = vpop.permute.xlu0 %972
        %974 = vset.pattern.permute.xlu0 0
        %975 = vperm.xlu0 %974, %v814
        %v976 = vpop.permute.xlu0 %975
        %977 = vset.pattern.permute.xlu0 0
        %978 = vperm.xlu0 %977, %v863
        %v979 = vpop.permute.xlu0 %978
        %980 = vset.pattern.permute.xlu0 0
        %981 = vperm.xlu0 %980, %v912
        %v982 = vpop.permute.xlu0 %981
        %983 = vset.pattern.permute.xlu0 0
        %984 = vperm.xlu0 %983, %v961
        %v985 = vpop.permute.xlu0 %984
        %v986 = vlaneseq
        %v987 = vand.u32 %v986, 127
        %v988 = vlaneseq
        %v989 = vshrl.u32 %v988, 7
        %v990 = vsub.s32 %v987, %v989
        %v991 = vrot.slane %v964, %v990
        %v992 = vadd.s32 %v987, 4294967288
        %v993 = vlaneseq
        %v994 = vshrl.u32 %v993, 7
        %v995 = vsub.s32 %v992, %v994
        %v996 = vrot.slane %v967, %v995
        %vm997 = vcmask 130112
        %v998 = vsel %vm997, %v996, %v991
        %v999 = vadd.s32 %v987, 4294967280
        %v1000 = vlaneseq
        %v1001 = vshrl.u32 %v1000, 7
        %v1002 = vsub.s32 %v999, %v1001
        %v1003 = vrot.slane %v970, %v1002
        %vm1004 = vcmask 195712
        %v1005 = vsel %vm1004, %v1003, %v998
        %v1006 = vadd.s32 %v987, 4294967272
        %v1007 = vlaneseq
        %v1008 = vshrl.u32 %v1007, 7
        %v1009 = vsub.s32 %v1006, %v1008
        %v1010 = vrot.slane %v973, %v1009
        %vm1011 = vcmask 261312
        %v1012 = vsel %vm1011, %v1010, %v1005
        %v1013 = vadd.s32 %v987, 4294967264
        %v1014 = vlaneseq
        %v1015 = vshrl.u32 %v1014, 7
        %v1016 = vsub.s32 %v1013, %v1015
        %v1017 = vrot.slane %v976, %v1016
        %vm1018 = vcmask 326912
        %v1019 = vsel %vm1018, %v1017, %v1012
        %v1020 = vadd.s32 %v987, 4294967256
        %v1021 = vlaneseq
        %v1022 = vshrl.u32 %v1021, 7
        %v1023 = vsub.s32 %v1020, %v1022
        %v1024 = vrot.slane %v979, %v1023
        %vm1025 = vcmask 392512
        %v1026 = vsel %vm1025, %v1024, %v1019
        %v1027 = vadd.s32 %v987, 4294967248
        %v1028 = vlaneseq
        %v1029 = vshrl.u32 %v1028, 7
        %v1030 = vsub.s32 %v1027, %v1029
        %v1031 = vrot.slane %v982, %v1030
        %vm1032 = vcmask 458112
        %v1033 = vsel %vm1032, %v1031, %v1026
        %v1034 = vadd.s32 %v987, 4294967240
        %v1035 = vlaneseq
        %v1036 = vshrl.u32 %v1035, 7
        %v1037 = vsub.s32 %v1034, %v1036
        %v1038 = vrot.slane %v985, %v1037
        %vm1039 = vcmask 523712
        %v1040 = vsel %vm1039, %v1038, %v1033
        %v1042 = vunpack.c.l.s4 1966171168
        %v1043 = vunpack.c.0.s8 %v1042
        %v1044 = vlaneseq
        %v1045 = vshrl.u32 %v1044, 7
        %v1046 = vsub.s32 %v1043, %v1045
        %v1047 = vrot.slane %v1040, %v1046
        %v1049 = vunpack.c.l.s4 1966171168
        %v1050 = vunpack.c.0.s8 %v1049
        %v1051 = vlaneseq
        %v1052 = vshrl.u32 %v1051, 7
        %v1053 = vsub.s32 %v1050, %v1052
        %v1054 = vrot.slane %v1047, %v1053
        %v1056 = vadd.f32 %v265, %v1054
        %vm1057 = vcmask 516096
        %1058 = vst.msk [vmem:[#allocation2] sm:$0x1] %vm1057, %v1056
        // Predicated region
        $region49: #{tpu_custom_call.1} parent=39 // pred_check
          %p1059 = pneg %p259
        $region50: #{tpu_custom_call.1} parent=39 // pred_check_branch
          %1061 = sbr.rel (%p1059) target = $region52
        $region51: #{tpu_custom_call.1} parent=39 // pred_region
          %v1062 = vld [vmem:[#allocation2] sm:$0x1]
          %v1063 = vmul.f32 %v1062, 0.00390625
          %v1064 = vld [vmem:[%s1] sm:$0xff]
          %v1065 = vld [vmem:[%s1 + $0x8] sm:$0xff]
          %v1066 = vld [vmem:[%s1 + $0x10] sm:$0xff]
          %v1067 = vld [vmem:[%s1 + $0x18] sm:$0xff]
          %v1068 = vld [vmem:[%s1 + $0x20] sm:$0xff]
          %v1069 = vld [vmem:[%s1 + $0x28] sm:$0xff]
          %v1070 = vld [vmem:[%s1 + $0x30] sm:$0xff]
          %v1071 = vld [vmem:[%s1 + $0x38] sm:$0xff]
          %v1072 = vld [vmem:[%s2] sm:$0x1]
          %vm1073 = vcmask 523264
          %v1075 = vsel %vm1073, %v1063, 0
          %1077 = vmatprep.subr.mxu0 0.0
          %1078 = vmatpush1.msra.mxu0 %v1064
          %1079 = vmatprep.subr.mxu0 0.0
          %1080 = vmatpush1.msra.mxu0 %v1065
          %1081 = vmatprep.subr.mxu0 0.0
          %1082 = vmatpush1.msra.mxu0 %v1066
          %1083 = vmatprep.subr.mxu0 0.0
          %1084 = vmatpush1.msra.mxu0 %v1067
          %1085 = vmatprep.subr.mxu0 0.0
          %1086 = vmatpush1.msra.mxu0 %v1068
          %1087 = vmatprep.subr.mxu0 0.0
          %1088 = vmatpush1.msra.mxu0 %v1069
          %1089 = vmatprep.subr.mxu0 0.0
          %1090 = vmatpush1.msra.mxu0 %v1070
          %1091 = vmatprep.subr.mxu0 0.0
          %1092 = vmatpush1.msra.mxu0 %v1071
          %1093 = vmatprep.subr.mxu0 0.0
          %1094 = vmatpush1.msra.mxu0 0.0
          %1095 = vmatprep.subr.mxu0 0.0
          %1096 = vmatpush1.msra.mxu0 0.0
          %1097 = vmatprep.subr.mxu0 0.0
          %1098 = vmatpush1.msra.mxu0 0.0
          %1099 = vmatprep.subr.mxu0 0.0
          %1100 = vmatpush1.msra.mxu0 0.0
          %1101 = vmatprep.subr.mxu0 0.0
          %1102 = vmatpush1.msra.mxu0 0.0
          %1103 = vmatprep.subr.mxu0 0.0
          %1104 = vmatpush1.msra.mxu0 0.0
          %1105 = vmatprep.subr.mxu0 0.0
          %1106 = vmatpush1.msra.mxu0 0.0
          %1107 = vmatprep.subr.mxu0 0.0
          %1108 = vmatpush1.msra.mxu0 0.0
          %1109 = vmatprep.subr.mxu0 0.0
          %1110 = vmatpush1.msra.mxu0 0.0
          %1111 = vmatprep.subr.mxu0 0.0
          %1112 = vmatpush1.msra.mxu0 0.0
          %1113 = vmatprep.subr.mxu0 0.0
          %1114 = vmatpush1.msra.mxu0 0.0
          %1115 = vmatprep.subr.mxu0 0.0
          %1116 = vmatpush1.msra.mxu0 0.0
          %1117 = vmatprep.subr.mxu0 0.0
          %1118 = vmatpush1.msra.mxu0 0.0
          %1119 = vmatprep.subr.mxu0 0.0
          %1120 = vmatpush1.msra.mxu0 0.0
          %1121 = vmatprep.subr.mxu0 0.0
          %1122 = vmatpush1.msra.mxu0 0.0
          %1123 = vmatprep.subr.mxu0 0.0
          %1124 = vmatpush1.msra.mxu0 0.0
          %1125 = vmatprep.subr.mxu0 0.0
          %1126 = vmatpush1.msra.mxu0 0.0
          %1127 = vmatprep.subr.mxu0 0.0
          %1128 = vmatpush1.msra.mxu0 0.0
          %1129 = vmatprep.subr.mxu0 0.0
          %1130 = vmatpush1.msra.mxu0 0.0
          %1131 = vmatprep.subr.mxu0 0.0
          %1132 = vmatpush1.msra.mxu0 0.0
          %1133 = vmatprep.subr.mxu0 0.0
          %1134 = vmatpush1.msra.mxu0 0.0
          %1135 = vmatprep.subr.mxu0 0.0
          %1136 = vmatpush1.msra.mxu0 0.0
          %1137 = vmatprep.subr.mxu0 0.0
          %1138 = vmatpush1.msra.mxu0 0.0
          %1139 = vmatprep.subr.mxu0 0.0
          %1140 = vmatpush1.msra.mxu0 0.0
          %1141 = vmatprep.mubr.f32.mxu0 0.0
          %1142 = vmatmul.mubr.f32.gmra.mrb[0].mxu0 %v1075
          %v1143 = vpop.f32.mrb[0].mxu0
          %v1144 = vadd.f32 %v1072, %v1143
          %v1145 = vpop.f32.mrb[0].mxu0
          %1146 = vdwg.mxu0
          %v1147 = vmax.f32 %v1144, 0.0
          %v1148 = vld [vmem:[%s3] sm:$0xf]
          %v1149 = vld [vmem:[%s4] sm:$0x1]
          %vm1150 = vcmask 31744
          %v1152 = vsel %vm1150, %v1147, 0
          %vm1154 = vcmask 1043456
          %v1156 = vsel %vm1154, %v1148, 0
          %1158 = vmatprep.subr.mxu0 0.0
          %1159 = vmatpush1.msra.mxu0 %v1156
          %1160 = vmatprep.subr.mxu0 0.0
          %1161 = vmatpush1.msra.mxu0 0.0
          %1162 = vmatprep.subr.mxu0 0.0
          %1163 = vmatpush1.msra.mxu0 0.0
          %1164 = vmatprep.subr.mxu0 0.0
          %1165 = vmatpush1.msra.mxu0 0.0
          %1166 = vmatprep.subr.mxu0 0.0
          %1167 = vmatpush1.msra.mxu0 0.0
          %1168 = vmatprep.subr.mxu0 0.0
          %1169 = vmatpush1.msra.mxu0 0.0
          %1170 = vmatprep.subr.mxu0 0.0
          %1171 = vmatpush1.msra.mxu0 0.0
          %1172 = vmatprep.subr.mxu0 0.0
          %1173 = vmatpush1.msra.mxu0 0.0
          %1174 = vmatprep.subr.mxu0 0.0
          %1175 = vmatpush1.msra.mxu0 0.0
          %1176 = vmatprep.subr.mxu0 0.0
          %1177 = vmatpush1.msra.mxu0 0.0
          %1178 = vmatprep.subr.mxu0 0.0
          %1179 = vmatpush1.msra.mxu0 0.0
          %1180 = vmatprep.subr.mxu0 0.0
          %1181 = vmatpush1.msra.mxu0 0.0
          %1182 = vmatprep.subr.mxu0 0.0
          %1183 = vmatpush1.msra.mxu0 0.0
          %1184 = vmatprep.subr.mxu0 0.0
          %1185 = vmatpush1.msra.mxu0 0.0
          %1186 = vmatprep.subr.mxu0 0.0
          %1187 = vmatpush1.msra.mxu0 0.0
          %1188 = vmatprep.subr.mxu0 0.0
          %1189 = vmatpush1.msra.mxu0 0.0
          %1190 = vmatprep.subr.mxu0 0.0
          %1191 = vmatpush1.msra.mxu0 0.0
          %1192 = vmatprep.subr.mxu0 0.0
          %1193 = vmatpush1.msra.mxu0 0.0
          %1194 = vmatprep.subr.mxu0 0.0
          %1195 = vmatpush1.msra.mxu0 0.0
          %1196 = vmatprep.subr.mxu0 0.0
          %1197 = vmatpush1.msra.mxu0 0.0
          %1198 = vmatprep.subr.mxu0 0.0
          %1199 = vmatpush1.msra.mxu0 0.0
          %1200 = vmatprep.subr.mxu0 0.0
          %1201 = vmatpush1.msra.mxu0 0.0
          %1202 = vmatprep.subr.mxu0 0.0
          %1203 = vmatpush1.msra.mxu0 0.0
          %1204 = vmatprep.subr.mxu0 0.0
          %1205 = vmatpush1.msra.mxu0 0.0
          %1206 = vmatprep.subr.mxu0 0.0
          %1207 = vmatpush1.msra.mxu0 0.0
          %1208 = vmatprep.subr.mxu0 0.0
          %1209 = vmatpush1.msra.mxu0 0.0
          %1210 = vmatprep.subr.mxu0 0.0
          %1211 = vmatpush1.msra.mxu0 0.0
          %1212 = vmatprep.subr.mxu0 0.0
          %1213 = vmatpush1.msra.mxu0 0.0
          %1214 = vmatprep.subr.mxu0 0.0
          %1215 = vmatpush1.msra.mxu0 0.0
          %1216 = vmatprep.subr.mxu0 0.0
          %1217 = vmatpush1.msra.mxu0 0.0
          %1218 = vmatprep.subr.mxu0 0.0
          %1219 = vmatpush1.msra.mxu0 0.0
          %1220 = vmatprep.subr.mxu0 0.0
          %1221 = vmatpush1.msra.mxu0 0.0
          %1222 = vmatprep.mubr.f32.mxu0 0.0
          %1223 = vmatmul.mubr.f32.gmra.mrb[0].mxu0 %v1152
          %v1224 = vpop.f32.mrb[0].mxu0
          %v1225 = vadd.f32 %v1149, %v1224
          %v1226 = vpop.f32.mrb[0].mxu0
          %1227 = vdwg.mxu0
          %v1228 = vsub.f32 0.0, %v1225
          %v1229 = vmul.f32 %v1228, 1.442695
          %v1230 = vpow.pop %v1229
          %v1231 = vadd.f32 %v1230, 1.0
          %v1232 = vrcp.pop %v1231
          %v1233 = vmul.f32 1.0, %v1232
          %1234 = vst.msk [vmem:[%s257] sm:$0x1] %vm1057, %v1233
        $region52: #{tpu_custom_call.1} parent=39 // pred_fallthru
          _
        %s1235 = sand.u32 %s154, 1
        %s1236 = scalar_lea.sflag [#allocation5], %s1235
        %s1237 = sand.u32 %s154, 1
        %s1238 = scalar_lea.vmem [#allocation6], %s1237
        // Predicated region
        $region53: #{tpu_custom_call.1} parent=39 // pred_check
          %p1239 = pneg %p164
        $region54: #{tpu_custom_call.1} parent=39 // pred_check_branch
          %1241 = sbr.rel (%p1239) target = $region56
        $region55: #{tpu_custom_call.1} parent=39 // pred_region
          %s1243 = ssub.s32 16, 16
          %1244 = vsyncadd %s1236, %s1243
          %s1245 = smul.addr %s26, 16
          %s1246 = scalar_lea.hbm %s5, %s1245
          %s1248 = sshll.u32 %s1238, 4
          %s1249 = int_to_ptr.vmem [resolvable:$true] %s1248
          %1251 = dma.vmem_to_hbm [thread:$0]  %s1249, 16, %s1246, %s1236
        $region56: #{tpu_custom_call.1} parent=39 // pred_fallthru
          _
      $region40: #{tpu_custom_call.1} parent=5 // pred_fallthru
        _
      %p1252 = scmp.le.s32.totalorder 2, %s17
      // Predicated region
      $region57: #{tpu_custom_call.1} parent=5 // pred_check
        %p1253 = pneg %p1252
      $region58: #{tpu_custom_call.1} parent=5 // pred_check_branch
        %1255 = sbr.rel (%p1253) target = $region60
      $region59: #{tpu_custom_call.1} parent=5 // pred_region
        %s1256 = ssub.s32 %s17, 2
        // Predicated region
        $region61: #{tpu_custom_call.1} parent=59 // pred_check
          %p1257 = pneg %p170
        $region62: #{tpu_custom_call.1} parent=59 // pred_check_branch
          %1259 = sbr.rel (%p1257) target = $region64
        $region63: #{tpu_custom_call.1} parent=59 // pred_region
          %s1260 = sand.u32 %s155, 1
          %s1261 = scalar_lea.sflag [#allocation5], %s1260
          %s1262 = sand.u32 %s155, 1
          %s1263 = scalar_lea.vmem [#allocation6], %s1262
          %1264 = dma.done %s1261, 16
        $region64: #{tpu_custom_call.1} parent=59 // pred_fallthru
          _
      $region60: #{tpu_custom_call.1} parent=5 // pred_fallthru
        _
    $region6: #{tpu_custom_call.1} parent=1 // loop_footer
      %s21 = sadd.s32 1, %s17
    $region7: #{tpu_custom_call.1} parent=1 // loop_footer_branch
      %16 = sbr.rel target = $region3
    $region8: #{tpu_custom_call.1} parent=1 // loop_exit
      _
    %1265 = vsyncpa [#allocation4], 1
    %s1266 = scalar_lea.sflag [#allocation4], 1
    %1267 = vsyncpa %s1266, 1
    %1268 = vsyncpa [#allocation5], 1
    %s1269 = scalar_lea.sflag [#allocation5], 1
    %1270 = vsyncpa %s1269, 1

</llo_original>
